<compile_context>
chip_gen: v5e
topology: v5e:2x2
jax: 0.10.0
libtpu: 0.0.40
codegen_flags: <defaults>
</compile_context>

<pallas_src>
import jax
import jax.numpy as jnp
from jax.experimental import pallas as pl
from jax.experimental.pallas import tpu as pltpu

HIDDEN = 128
BN_EPS = 1e-5
FUSED_MAX_B = 4096      # whole-batch-in-VMEM fast path threshold
TILE_B = 1024           # batch tile for the large-B fallback (multiple of 8)


def _round_up(x, m):
    return (x + m - 1) // m * m


# ----------------------------------------------------------------------------
# Fused fast path: whole batch resident in VMEM, single launch.
# ----------------------------------------------------------------------------
def _critic_fused_kernel(s_ref, a_ref, w1_ref, g1_ref, beta1_ref,
                         w2_ref, b2_ref, w3_ref, b3_ref, q_ref):
    # fc1 on the MXU (bf16 operands, f32 accumulate). b1 is omitted: a
    # per-feature constant shift cancels exactly under training-mode BN.
    z = jnp.dot(s_ref[...], w1_ref[...], preferred_element_type=jnp.float32)

    # BatchNorm statistics over the full batch (two-pass / centered variance).
    inv_n = 1.0 / z.shape[0]
    mean = jnp.sum(z, axis=0, keepdims=True) * inv_n
    d = z - mean
    var = jnp.sum(d * d, axis=0, keepdims=True) * inv_n
    scale = jax.lax.rsqrt(var + BN_EPS) * g1_ref[...]
    x = jnp.maximum(d * scale + beta1_ref[...], 0.0)

    # fc2 over cat([x, a], 1): one fused MXU pass, K = 128 + act_dim.
    xa = jnp.concatenate([x.astype(jnp.bfloat16), a_ref[...]], axis=1)
    h2 = jnp.dot(xa, w2_ref[...], preferred_element_type=jnp.float32) + b2_ref[...]
    x2 = jnp.maximum(h2, 0.0)

    # fc3 (N = 1): VPU multiply + lane reduction, keep off the MXU.
    q_ref[...] = jnp.sum(x2 * w3_ref[...], axis=-1, keepdims=True) + b3_ref[...]


# ----------------------------------------------------------------------------
# Large-B fallback, pass 1: BN statistics -> folded (scale, shift).
# Grid: batch tiles ('arbitrary', accumulate across tiles in VMEM scratch).
# ----------------------------------------------------------------------------
def _bn_stats_kernel(nvalid_ref,                      # scalar prefetch (SMEM)
                     s_ref, w1_ref, g1_ref, beta1_ref,
                     scale_ref, shift_ref,            # outputs (1, HIDDEN)
                     sum_sc, sumsq_sc):               # VMEM scratch
    i = pl.program_id(0)
    nt = pl.num_programs(0)
    tb = s_ref.shape[0]

    @pl.when(i == 0)
    def _():
        sum_sc[...] = jnp.zeros_like(sum_sc)
        sumsq_sc[...] = jnp.zeros_like(sumsq_sc)

    z = jnp.dot(s_ref[...], w1_ref[...], preferred_element_type=jnp.float32)

    # Full tiles: no masking needed.
    @pl.when(i < nt - 1)
    def _():
        sum_sc[...] += jnp.sum(z, axis=0, keepdims=True)
        sumsq_sc[...] += jnp.sum(z * z, axis=0, keepdims=True)

    # Last tile: mask rows past the true batch size (NaN-safe select), then
    # finalize folded scale/shift. Single-pass E[z^2]-mean^2 variance here
    # (clamped at 0) to avoid a third pass over the data.
    @pl.when(i == nt - 1)
    def _():
        rows = i * tb + jax.lax.broadcasted_iota(jnp.int32, z.shape, 0)
        zm = jnp.where(rows < nvalid_ref[0], z, 0.0)
        sum_sc[...] += jnp.sum(zm, axis=0, keepdims=True)
        sumsq_sc[...] += jnp.sum(zm * zm, axis=0, keepdims=True)
        n = nvalid_ref[0].astype(jnp.float32)
        mean = sum_sc[...] / n
        var = jnp.maximum(sumsq_sc[...] / n - mean * mean, 0.0)
        scale = jax.lax.rsqrt(var + BN_EPS) * g1_ref[...]
        scale_ref[...] = scale
        shift_ref[...] = beta1_ref[...] - mean * scale


# ----------------------------------------------------------------------------
# Large-B fallback, pass 2: apply BN + fc2 + fc3 per batch tile ('parallel').
# ----------------------------------------------------------------------------
def _critic_apply_kernel(s_ref, a_ref, scale_ref, shift_ref,
                         w1_ref, w2_ref, b2_ref, w3_ref, b3_ref, q_ref):
    z = jnp.dot(s_ref[...], w1_ref[...], preferred_element_type=jnp.float32)
    x = jnp.maximum(z * scale_ref[...] + shift_ref[...], 0.0)
    xa = jnp.concatenate([x.astype(jnp.bfloat16), a_ref[...]], axis=1)
    h2 = jnp.dot(xa, w2_ref[...], preferred_element_type=jnp.float32) + b2_ref[...]
    x2 = jnp.maximum(h2, 0.0)
    q_ref[...] = jnp.sum(x2 * w3_ref[...], axis=-1, keepdims=True) + b3_ref[...]


# ----------------------------------------------------------------------------
# VMEM footprint estimates (lane-padded) -> explicit vmem_limit_bytes.
# ----------------------------------------------------------------------------
def _fused_vmem_bytes(b, obs_dim, act_dim):
    bp = _round_up(max(b, 8), 8)
    obs_l = _round_up(obs_dim, 128)
    act_l = _round_up(act_dim, 128)
    per_row = (2 * (obs_l + act_l)                 # s, a (bf16)
               + 4 * (3 * HIDDEN + 128)            # z, h2, x2, q (f32)
               + 2 * (2 * HIDDEN + act_l))         # x, xa (bf16)
    weights = 2 * (obs_dim + HIDDEN + act_dim) * HIDDEN + 6 * HIDDEN * 4
    return bp * per_row + weights + (64 << 10)


def _tiled_vmem_bytes(tb, obs_dim, act_dim):
    obs_l = _round_up(obs_dim, 128)
    act_l = _round_up(act_dim, 128)
    streamed = 2 * 2 * tb * (obs_l + act_l)        # double-buffered bf16 s/a tiles
    out = 2 * tb * 128 * 4                         # double-buffered q tile
    temps = tb * (4 * 3 * HIDDEN + 2 * (2 * HIDDEN + act_l))
    weights = 2 * (obs_dim + HIDDEN + act_dim) * HIDDEN + 6 * HIDDEN * 4
    return streamed + out + temps + weights + (64 << 10)


# ----------------------------------------------------------------------------
# Wrapper
# ----------------------------------------------------------------------------
@jax.jit
def critic_forward(s, a, params):
    (w1, b1, g1, beta1, w2x, w2a, b2, w3, b3) = params
    del b1  # cancels exactly under training-mode BatchNorm (per-feature shift)
    B, obs_dim = s.shape
    act_dim = a.shape[1]

    # bf16 matmul operands prepared once in the wrapper (halves streamed bytes).
    s_bf = s.astype(jnp.bfloat16)
    a_bf = a.astype(jnp.bfloat16)
    w1b = w1.astype(jnp.bfloat16)
    w2b = jnp.concatenate([w2x, w2a], axis=0).astype(jnp.bfloat16)  # (128+act, 128)
    w3r = w3.reshape(1, HIDDEN).astype(jnp.float32)
    b3r = b3.reshape(1, 1).astype(jnp.float32)

    flops = 2 * B * HIDDEN * (obs_dim + HIDDEN + act_dim + 1)
    streamed_bytes = (s_bf.size + a_bf.size) * 2 + B * 4
    weight_bytes = ((w1b.size + w2b.size) * 2
                    + (g1.size + beta1.size + b2.size + w3r.size + 1) * 4)

    # ---------------- fused single-launch fast path -------------------------
    if B <= FUSED_MAX_B:
        vmem_limit = int(min(56 << 20,
                             max(8 << 20, 2 * _fused_vmem_bytes(B, obs_dim, act_dim))))
        vspec = pl.BlockSpec(memory_space=pltpu.MemorySpace.VMEM)
        return pl.pallas_call(
            _critic_fused_kernel,
            out_shape=jax.ShapeDtypeStruct((B, 1), jnp.float32),
            in_specs=[vspec] * 9,
            out_specs=vspec,
            compiler_params=pltpu.CompilerParams(vmem_limit_bytes=vmem_limit),
            cost_estimate=pl.CostEstimate(
                flops=flops, transcendentals=HIDDEN,
                bytes_accessed=streamed_bytes + weight_bytes + B * 4),
        )(s_bf, a_bf, w1b, g1, beta1, w2b, b2, w3r, b3r)

    # ---------------- large-B fallback: two batch-tiled passes --------------
    n_tiles = pl.cdiv(B, TILE_B)       # no padding copies; last tile is masked
    nvalid = jnp.array([B], dtype=jnp.int32)
    vmem_limit = int(min(48 << 20,
                         max(8 << 20, 2 * _tiled_vmem_bytes(TILE_B, obs_dim, act_dim))))

    const_p = lambda i, nv: (0, 0)     # noqa: E731
    scale, shift = pl.pallas_call(
        _bn_stats_kernel,
        out_shape=(jax.ShapeDtypeStruct((1, HIDDEN), jnp.float32),
                   jax.ShapeDtypeStruct((1, HIDDEN), jnp.float32)),
        grid_spec=pltpu.PrefetchScalarGridSpec(
            num_scalar_prefetch=1,
            grid=(n_tiles,),
            in_specs=[pl.BlockSpec((TILE_B, obs_dim), lambda i, nv: (i, 0)),
                      pl.BlockSpec((obs_dim, HIDDEN), const_p),
                      pl.BlockSpec((1, HIDDEN), const_p),
                      pl.BlockSpec((1, HIDDEN), const_p)],
            out_specs=[pl.BlockSpec((1, HIDDEN), const_p),
                       pl.BlockSpec((1, HIDDEN), const_p)],
            scratch_shapes=[pltpu.VMEM((1, HIDDEN), jnp.float32),
                            pltpu.VMEM((1, HIDDEN), jnp.float32)]),
        compiler_params=pltpu.CompilerParams(
            dimension_semantics=("arbitrary",),
            vmem_limit_bytes=vmem_limit),
    )(nvalid, s_bf, w1b, g1, beta1)

    tile = lambda i: (i, 0)            # noqa: E731
    const = lambda i: (0, 0)           # noqa: E731
    return pl.pallas_call(
        _critic_apply_kernel,
        out_shape=jax.ShapeDtypeStruct((B, 1), jnp.float32),
        grid_spec=pl.GridSpec(
            grid=(n_tiles,),
            in_specs=[pl.BlockSpec((TILE_B, obs_dim), tile),           # s (bf16)
                      pl.BlockSpec((TILE_B, act_dim), tile),           # a (bf16)
                      pl.BlockSpec((1, HIDDEN), const),                # scale
                      pl.BlockSpec((1, HIDDEN), const),                # shift
                      pl.BlockSpec((obs_dim, HIDDEN), const),          # w1 (bf16)
                      pl.BlockSpec((HIDDEN + act_dim, HIDDEN), const), # w2 (bf16)
                      pl.BlockSpec((1, HIDDEN), const),                # b2
                      pl.BlockSpec((1, HIDDEN), const),                # w3 row
                      pl.BlockSpec((1, 1), const)],                    # b3
            out_specs=pl.BlockSpec((TILE_B, 1), tile)),
        compiler_params=pltpu.CompilerParams(
            dimension_semantics=("parallel",),
            vmem_limit_bytes=vmem_limit),
        cost_estimate=pl.CostEstimate(
            flops=flops, transcendentals=0,
            bytes_accessed=streamed_bytes + weight_bytes + B * 4),
    )(s_bf, a_bf, scale, shift, w1b, w2b, b2, w3r, b3r)


# ----------------------------------------------------------------------------
# Parameter init (PyTorch Linear defaults: uniform +/- 1/sqrt(fan_in))
# ----------------------------------------------------------------------------
def init_params(key, obs_dim, act_dim):
    ks = jax.random.split(key, 4)

    def lin(k, fan_in, fan_out):
        kw, kb = jax.random.split(k)
        bound = 1.0 / jnp.sqrt(fan_in)
        w = jax.random.uniform(kw, (fan_in, fan_out), jnp.float32, -bound, bound)
        b = jax.random.uniform(kb, (1, fan_out), jnp.float32, -bound, bound)
        return w, b

    w1, b1 = lin(ks[0], obs_dim, HIDDEN)
    g1 = jnp.ones((1, HIDDEN), jnp.float32)       # bn1 weight
    beta1 = jnp.zeros((1, HIDDEN), jnp.float32)   # bn1 bias

    fan_in2 = HIDDEN + act_dim
    kw2, kb2 = jax.random.split(ks[1])
    bound2 = 1.0 / jnp.sqrt(fan_in2)
    w2_full = jax.random.uniform(kw2, (fan_in2, HIDDEN), jnp.float32, -bound2, bound2)
    b2 = jax.random.uniform(kb2, (1, HIDDEN), jnp.float32, -bound2, bound2)
    w2x = w2_full[:HIDDEN, :]
    w2a = w2_full[HIDDEN:, :]

    w3, b3 = lin(ks[2], HIDDEN, 1)
    return (w1, b1, g1, beta1, w2x, w2a, b2, w3, b3)


# ----------------------------------------------------------------------------
# References for correctness checks
# ----------------------------------------------------------------------------
def critic_reference_f32(s, a, params):
    """Pure f32 reference (PyTorch training-mode semantics)."""
    (w1, b1, g1, beta1, w2x, w2a, b2, w3, b3) = params
    h1 = s @ w1 + b1
    mean = jnp.mean(h1, axis=0, keepdims=True)
    var = jnp.mean((h1 - mean) ** 2, axis=0, keepdims=True)
    x = jnp.maximum((h1 - mean) / jnp.sqrt(var + BN_EPS) * g1 + beta1, 0.0)
    h2 = x @ w2x + a @ w2a + b2
    x2 = jnp.maximum(h2, 0.0)
    return x2 @ w3 + b3


def critic_reference_bf16(s, a, params):
    """Reference mirroring the fused kernel's bf16/f32 recipe exactly."""
    (w1, b1, g1, beta1, w2x, w2a, b2, w3, b3) = params
    bf = jnp.bfloat16
    z = jnp.dot(s.astype(bf), w1.astype(bf), preferred_element_type=jnp.float32)
    mean = jnp.mean(z, axis=0, keepdims=True)
    d = z - mean
    var = jnp.mean(d * d, axis=0, keepdims=True)
    scale = jax.lax.rsqrt(var + BN_EPS) * g1
    x = jnp.maximum(d * scale + beta1, 0.0)
    xa = jnp.concatenate([x.astype(bf), a.astype(bf)], axis=1)
    w2 = jnp.concatenate([w2x, w2a], axis=0).astype(bf)
    h2 = jnp.dot(xa, w2, preferred_element_type=jnp.float32) + b2
    x2 = jnp.maximum(h2, 0.0)
    return (jnp.sum(x2 * w3.reshape(1, HIDDEN), axis=-1, keepdims=True)
            + b3.reshape(1, 1))


if __name__ == "__main__":
    key = jax.random.PRNGKey(0)
    k_s, k_a, k_p = jax.random.split(key, 3)

    B, OBS_DIM, ACT_DIM = 8, 16, 4
    s = jax.random.normal(k_s, (B, OBS_DIM), jnp.float32)
    a = jax.random.normal(k_a, (B, ACT_DIM), jnp.float32)
    params = init_params(k_p, OBS_DIM, ACT_DIM)

    q = critic_forward(s, a, params)
    q = jax.block_until_ready(q)
    assert q.shape == (B, 1)

    # Tight check against a reference using the identical bf16/f32 recipe.
    q_bf = critic_reference_bf16(s, a, params)
    assert jnp.allclose(q, q_bf, atol=1e-2, rtol=1e-2), (q, q_bf)

    # Loose check against the pure-f32 PyTorch-semantics reference.
    q_f32 = critic_reference_f32(s, a, params)
    assert jnp.allclose(q, q_f32, atol=5e-2, rtol=5e-2), (q, q_f32)

    print("KERNEL_OK")
</pallas_src>

<mosaic_0001>
module attributes {stable_mosaic.version = 11 : i64} {
  func.func @_critic_fused_kernel(%arg0: memref<8x16xbf16, #tpu.memory_space<vmem>>, %arg1: memref<8x4xbf16, #tpu.memory_space<vmem>>, %arg2: memref<16x128xbf16, #tpu.memory_space<vmem>>, %arg3: memref<1x128xf32, #tpu.memory_space<vmem>>, %arg4: memref<1x128xf32, #tpu.memory_space<vmem>>, %arg5: memref<132x128xbf16, #tpu.memory_space<vmem>>, %arg6: memref<1x128xf32, #tpu.memory_space<vmem>>, %arg7: memref<1x128xf32, #tpu.memory_space<vmem>>, %arg8: memref<1x1xf32, #tpu.memory_space<vmem>>, %arg9: memref<8x1xf32, #tpu.memory_space<vmem>>) attributes {dimension_semantics = [], scalar_prefetch = 0 : i64, scratch_operands = 0 : i64, tpu.core_type = #tpu.core_type<tc>} {
    %c0 = arith.constant 0 : index
    %c0_0 = arith.constant 0 : index
    %0 = vector.load %arg0[%c0, %c0_0] : memref<8x16xbf16, #tpu.memory_space<vmem>>, vector<8x16xbf16>
    %c0_1 = arith.constant 0 : index
    %c0_2 = arith.constant 0 : index
    %1 = vector.load %arg2[%c0_1, %c0_2] : memref<16x128xbf16, #tpu.memory_space<vmem>>, vector<16x128xbf16>
    %cst = arith.constant dense<0.000000e+00> : vector<8x128xf32>
    %2 = tpu.matmul %0, %1, %cst {dimension_numbers = #tpu.dot_dimension_numbers<[1], [0], [0], [1], [0, 0, 1, 1], [], []>} : vector<8x16xbf16>, vector<16x128xbf16>, vector<8x128xf32> -> vector<8x128xf32>
    %cst_3 = arith.constant dense<0.000000e+00> : vector<128xf32>
    %3 = vector.multi_reduction <add>, %2, %cst_3 [0] : vector<8x128xf32> to vector<128xf32>
    %4 = vector.shape_cast %3 : vector<128xf32> to vector<1x128xf32>
    %cst_4 = arith.constant 1.250000e-01 : f32
    %5 = vector.broadcast %cst_4 : f32 to vector<1x128xf32>
    %6 = arith.mulf %4, %5 : vector<1x128xf32>
    %7 = vector.broadcast %6 : vector<1x128xf32> to vector<8x128xf32>
    %8 = arith.subf %2, %7 : vector<8x128xf32>
    %9 = arith.mulf %8, %8 : vector<8x128xf32>
    %cst_5 = arith.constant dense<0.000000e+00> : vector<128xf32>
    %10 = vector.multi_reduction <add>, %9, %cst_5 [0] : vector<8x128xf32> to vector<128xf32>
    %11 = vector.shape_cast %10 : vector<128xf32> to vector<1x128xf32>
    %cst_6 = arith.constant 1.250000e-01 : f32
    %12 = vector.broadcast %cst_6 : f32 to vector<1x128xf32>
    %13 = arith.mulf %11, %12 : vector<1x128xf32>
    %cst_7 = arith.constant 9.99999974E-6 : f32
    %14 = vector.broadcast %cst_7 : f32 to vector<1x128xf32>
    %15 = arith.addf %13, %14 : vector<1x128xf32>
    %16 = math.rsqrt %15 : vector<1x128xf32>
    %c0_8 = arith.constant 0 : index
    %c0_9 = arith.constant 0 : index
    %17 = vector.load %arg3[%c0_8, %c0_9] : memref<1x128xf32, #tpu.memory_space<vmem>>, vector<1x128xf32>
    %18 = arith.mulf %16, %17 : vector<1x128xf32>
    %19 = vector.broadcast %18 : vector<1x128xf32> to vector<8x128xf32>
    %20 = arith.mulf %8, %19 : vector<8x128xf32>
    %c0_10 = arith.constant 0 : index
    %c0_11 = arith.constant 0 : index
    %21 = vector.load %arg4[%c0_10, %c0_11] : memref<1x128xf32, #tpu.memory_space<vmem>>, vector<1x128xf32>
    %22 = vector.broadcast %21 : vector<1x128xf32> to vector<8x128xf32>
    %23 = arith.addf %20, %22 : vector<8x128xf32>
    %cst_12 = arith.constant 0.000000e+00 : f32
    %24 = vector.broadcast %cst_12 : f32 to vector<8x128xf32>
    %25 = arith.maximumf %23, %24 : vector<8x128xf32>
    %26 = arith.truncf %25 : vector<8x128xf32> to vector<8x128xbf16>
    %c0_13 = arith.constant 0 : index
    %c0_14 = arith.constant 0 : index
    %27 = vector.load %arg1[%c0_13, %c0_14] : memref<8x4xbf16, #tpu.memory_space<vmem>>, vector<8x4xbf16>
    %28 = tpu.concatenate %26, %27 in 1 : vector<8x128xbf16>, vector<8x4xbf16> -> vector<8x132xbf16>
    %c0_15 = arith.constant 0 : index
    %c0_16 = arith.constant 0 : index
    %29 = vector.load %arg5[%c0_15, %c0_16] : memref<132x128xbf16, #tpu.memory_space<vmem>>, vector<132x128xbf16>
    %cst_17 = arith.constant dense<0.000000e+00> : vector<8x128xf32>
    %30 = tpu.matmul %28, %29, %cst_17 {dimension_numbers = #tpu.dot_dimension_numbers<[1], [0], [0], [1], [0, 0, 1, 1], [], []>} : vector<8x132xbf16>, vector<132x128xbf16>, vector<8x128xf32> -> vector<8x128xf32>
    %c0_18 = arith.constant 0 : index
    %c0_19 = arith.constant 0 : index
    %31 = vector.load %arg6[%c0_18, %c0_19] : memref<1x128xf32, #tpu.memory_space<vmem>>, vector<1x128xf32>
    %32 = vector.broadcast %31 : vector<1x128xf32> to vector<8x128xf32>
    %33 = arith.addf %30, %32 : vector<8x128xf32>
    %cst_20 = arith.constant 0.000000e+00 : f32
    %34 = vector.broadcast %cst_20 : f32 to vector<8x128xf32>
    %35 = arith.maximumf %33, %34 : vector<8x128xf32>
    %c0_21 = arith.constant 0 : index
    %c0_22 = arith.constant 0 : index
    %36 = vector.load %arg7[%c0_21, %c0_22] : memref<1x128xf32, #tpu.memory_space<vmem>>, vector<1x128xf32>
    %37 = vector.broadcast %36 : vector<1x128xf32> to vector<8x128xf32>
    %38 = arith.mulf %35, %37 : vector<8x128xf32>
    %cst_23 = arith.constant dense<0.000000e+00> : vector<8xf32>
    %39 = vector.multi_reduction <add>, %38, %cst_23 [1] : vector<8x128xf32> to vector<8xf32>
    %40 = vector.shape_cast %39 : vector<8xf32> to vector<8x1xf32>
    %c0_24 = arith.constant 0 : index
    %c0_25 = arith.constant 0 : index
    %41 = vector.load %arg8[%c0_24, %c0_25] : memref<1x1xf32, #tpu.memory_space<vmem>>, vector<1x1xf32>
    %42 = vector.broadcast %41 : vector<1x1xf32> to vector<8x1xf32>
    %43 = arith.addf %40, %42 : vector<8x1xf32>
    %c0_26 = arith.constant 0 : index
    %c0_27 = arith.constant 0 : index
    %44 = vector.load %arg9[%c0_26, %c0_27] : memref<8x1xf32, #tpu.memory_space<vmem>>, vector<8x1xf32>
    tpu.vector_store %arg9[%c0_26, %c0_27], %43 {strides = array<i32>} : memref<8x1xf32, #tpu.memory_space<vmem>>, vector<8x1xf32>,
    return
  }
}

</mosaic_0001>

<llo_original>
// kernel: critic_forward.1
$region0: #{critic_forward.1}
  #allocation0 [shape = 'u32[]', space=smem, size = 0x4, offset = 0x4, fixed_abs, tag = 'smem constant byte address 0x4 - core index']
  #allocation1 [shape = 'u32[72,128]{1,0:T(1,128)}', space=vmem, size = 0x9000, scoped, tag = 'internal scratch']
  #allocation2 [shape = 'f32[1,1]{1,0:T(1,128)S(1)}', space=vmem, size = 0x200, scoped, tag = 'scoped memory for critic_forward.1']
  %s0 = inlined_call_operand.vmem [shape: bf16[8,16], index: 0, kind: input, shape index: {}]
  %s1 = inlined_call_operand.vmem [shape: bf16[8,4], index: 1, kind: input, shape index: {}]
  %s2 = inlined_call_operand.vmem [shape: bf16[16,128], index: 2, kind: input, shape index: {}]
  %s3 = inlined_call_operand.vmem [shape: f32[1,128], index: 3, kind: input, shape index: {}]
  %s4 = inlined_call_operand.vmem [shape: f32[1,128], index: 4, kind: input, shape index: {}]
  %s5 = inlined_call_operand.vmem [shape: bf16[132,128], index: 5, kind: input, shape index: {}]
  %s6 = inlined_call_operand.vmem [shape: f32[1,128], index: 6, kind: input, shape index: {}]
  %s7 = inlined_call_operand.vmem [shape: f32[1,128], index: 7, kind: input, shape index: {}]
  %s8 = inlined_call_operand.<no memory space> [shape: f32[1,1], index: 8, kind: input, shape index: {}]
  %s9 = inlined_call_operand.vmem [shape: f32[8,1], index: 9, kind: output, shape index: {}]
  %s10 = sld [smem:[#allocation0]]
  $region46: #{critic_forward.1} parent=0
    _
  %s12 = ssub.s32 1, %s10
  %s13 = scalar_select 0, %s12, %s10
  %v14 = vstv %s8
  %15 = vst [vmem:[#allocation2] sm:$0x1] %v14
  // Predicated region
  $region2: #{critic_forward.1} parent=0 // pred_check
    _
  $region3: #{critic_forward.1} parent=0 // pred_check_branch
    %17 = sbr.rel (0) target = $region5
  $region4: #{critic_forward.1} parent=0 // pred_region
    _
  $region5: #{critic_forward.1} parent=0 // pred_fallthru
    _
  // Predicated region
  $region6: #{critic_forward.1} parent=0 // pred_check
    _
  $region7: #{critic_forward.1} parent=0 // pred_check_branch
    %19 = sbr.rel (0) target = $region9
  $region8: #{critic_forward.1} parent=0 // pred_region
    _
  $region9: #{critic_forward.1} parent=0 // pred_fallthru
    _
  // Predicated region
  $region10: #{critic_forward.1} parent=0 // pred_check
    _
  $region11: #{critic_forward.1} parent=0 // pred_check_branch
    %21 = sbr.rel (0) target = $region13
  $region12: #{critic_forward.1} parent=0 // pred_region
    _
  $region13: #{critic_forward.1} parent=0 // pred_fallthru
    _
  // Predicated region
  $region14: #{critic_forward.1} parent=0 // pred_check
    _
  $region15: #{critic_forward.1} parent=0 // pred_check_branch
    %23 = sbr.rel (0) target = $region17
  $region16: #{critic_forward.1} parent=0 // pred_region
    _
  $region17: #{critic_forward.1} parent=0 // pred_fallthru
    _
  // Predicated region
  $region18: #{critic_forward.1} parent=0 // pred_check
    _
  $region19: #{critic_forward.1} parent=0 // pred_check_branch
    %25 = sbr.rel (0) target = $region21
  $region20: #{critic_forward.1} parent=0 // pred_region
    _
  $region21: #{critic_forward.1} parent=0 // pred_fallthru
    _
  // Predicated region
  $region22: #{critic_forward.1} parent=0 // pred_check
    _
  $region23: #{critic_forward.1} parent=0 // pred_check_branch
    %27 = sbr.rel (0) target = $region25
  $region24: #{critic_forward.1} parent=0 // pred_region
    _
  $region25: #{critic_forward.1} parent=0 // pred_fallthru
    _
  // Predicated region
  $region26: #{critic_forward.1} parent=0 // pred_check
    _
  $region27: #{critic_forward.1} parent=0 // pred_check_branch
    %29 = sbr.rel (0) target = $region29
  $region28: #{critic_forward.1} parent=0 // pred_region
    _
  $region29: #{critic_forward.1} parent=0 // pred_fallthru
    _
  // Predicated region
  $region30: #{critic_forward.1} parent=0 // pred_check
    _
  $region31: #{critic_forward.1} parent=0 // pred_check_branch
    %31 = sbr.rel (0) target = $region33
  $region32: #{critic_forward.1} parent=0 // pred_region
    _
  $region33: #{critic_forward.1} parent=0 // pred_fallthru
    _
  // Predicated region
  $region34: #{critic_forward.1} parent=0 // pred_check
    _
  $region35: #{critic_forward.1} parent=0 // pred_check_branch
    %33 = sbr.rel (0) target = $region37
  $region36: #{critic_forward.1} parent=0 // pred_region
    _
  $region37: #{critic_forward.1} parent=0 // pred_fallthru
    _
  %v35 = vld [vmem:[%s0] sm:$0xf]
  %v36 = vld [vmem:[%s2] sm:$0xf]
  %v37 = vld [vmem:[%s2 + $0x4] sm:$0xf]
  %v40 = vunpack.c.l.b16 %v36
  %v41 = vunpack.c.l.b16 %v37
  %v42 = vpack.c.b16 %v41, %v40
  %vm44 = vcmask 130048
  %v46 = vsel %vm44, %v35, 0
  %48 = vmatpush.bf16.msra.mxu0 0
  %49 = vmatpush.bf16.msra.mxu0 0
  %50 = vmatpush.bf16.msra.mxu0 0
  %51 = vmatpush.bf16.msra.mxu0 0
  %52 = vmatpush.bf16.msra.mxu0 0
  %53 = vmatpush.bf16.msra.mxu0 0
  %54 = vmatpush.bf16.msra.mxu0 0
  %55 = vmatpush.bf16.msra.mxu0 %v42
  %56 = vmatmul.bf16.gmra.mxu0 %v46
  %v57 = vpop.f32.mrf.mxu0
  %v58 = vadd.f32 0.0, %v57
  %v59 = vpop.f32.mrf.mxu0
  %60 = vdwg.mxu0
  %v61 = vrot.slane %v58, 4
  %v62 = vadd.f32 %v58, %v61
  %v63 = vrot.slane %v62, 2
  %v64 = vadd.f32 %v62, %v63
  %v65 = vrot.slane %v64, 1
  %v66 = vadd.f32 %v64, %v65
  %v67 = vmul.f32 %v66, 0.125
  %v68 = vsub.f32 %v58, %v67
  %v69 = vmul.f32 %v68, %v68
  %v70 = vrot.slane %v69, 4
  %v71 = vadd.f32 %v69, %v70
  %v72 = vrot.slane %v71, 2
  %v73 = vadd.f32 %v71, %v72
  %v74 = vrot.slane %v73, 1
  %v75 = vadd.f32 %v73, %v74
  %v76 = vmul.f32 %v75, 0.125
  %v77 = vadd.f32 %v76, 1e-05
  %v78 = vrsqrt.pop %v77
  %v79 = vmul.f32 %v78, %v77
  %v80 = vmul.f32 %v79, %v78
  %v81 = vmul.f32 0.5, %v80
  %v82 = vsub.f32 1.5, %v81
  %v83 = vmul.f32 %v78, %v82
  %vm84 = vweird.f32 %v77
  %vm85 = vweird.f32 %v78
  %vm86 = vmor %vm84, %vm85
  %v87 = vsel %vm86, %v78, %v83
  %v88 = vld [vmem:[%s3] sm:$0x1]
  %v89 = vmul.f32 %v87, %v88
  %v90 = vperm.slane %v89, 0
  %v91 = vmul.f32 %v68, %v90
  %v92 = vld [vmem:[%s4] sm:$0x1]
  %v94 = vperm.slane %v92, 0
  %v96 = vadd.f32 %v91, %v94
  %v97 = vmax.f32 %v96, 0.0
  %v98 = vpack.c.bf16 %v97, %v97
  %v99 = vld [vmem:[%s1] sm:$0xf]
  %v100 = vld [vmem:[%s5] sm:$0xf]
  %v101 = vld [vmem:[%s5 + $0x4] sm:$0xf]
  %v102 = vld [vmem:[%s5 + $0x8] sm:$0xf]
  %v103 = vld [vmem:[%s5 + $0xc] sm:$0xf]
  %v104 = vld [vmem:[%s5 + $0x10] sm:$0xf]
  %v105 = vld [vmem:[%s5 + $0x14] sm:$0xf]
  %v106 = vld [vmem:[%s5 + $0x18] sm:$0xf]
  %v107 = vld [vmem:[%s5 + $0x1c] sm:$0xf]
  %v108 = vld [vmem:[%s5 + $0x20] sm:$0xf]
  %v109 = vld [vmem:[%s5 + $0x24] sm:$0xf]
  %v110 = vld [vmem:[%s5 + $0x28] sm:$0xf]
  %v111 = vld [vmem:[%s5 + $0x2c] sm:$0xf]
  %v112 = vld [vmem:[%s5 + $0x30] sm:$0xf]
  %v113 = vld [vmem:[%s5 + $0x34] sm:$0xf]
  %v114 = vld [vmem:[%s5 + $0x38] sm:$0xf]
  %v115 = vld [vmem:[%s5 + $0x3c] sm:$0xf]
  %v116 = vld [vmem:[%s5 + $0x40] sm:$0x3]
  %v117 = vld [vmem:[%s6] sm:$0x1]
  %v119 = vperm.slane %v117, 0
  %v138 = vunpack.c.l.b16 %v100
  %v139 = vunpack.c.l.b16 %v101
  %v140 = vunpack.c.l.b16 %v102
  %v141 = vunpack.c.l.b16 %v103
  %v142 = vunpack.c.l.b16 %v104
  %v143 = vunpack.c.l.b16 %v105
  %v144 = vunpack.c.l.b16 %v106
  %v145 = vunpack.c.l.b16 %v107
  %v146 = vunpack.c.l.b16 %v108
  %v147 = vunpack.c.l.b16 %v109
  %v148 = vunpack.c.l.b16 %v110
  %v149 = vunpack.c.l.b16 %v111
  %v150 = vunpack.c.l.b16 %v112
  %v151 = vunpack.c.l.b16 %v113
  %v152 = vunpack.c.l.b16 %v114
  %v153 = vunpack.c.l.b16 %v115
  %v154 = vunpack.c.l.b16 %v116
  %v155 = vpack.c.b16 %v139, %v138
  %v156 = vpack.c.b16 %v141, %v140
  %v157 = vpack.c.b16 %v143, %v142
  %v158 = vpack.c.b16 %v145, %v144
  %v159 = vpack.c.b16 %v147, %v146
  %v160 = vpack.c.b16 %v149, %v148
  %v161 = vpack.c.b16 %v151, %v150
  %v162 = vpack.c.b16 %v153, %v152
  %v163 = vpack.c.b16 %v154, %v154
  %vm172 = vcmask 31744
  %v174 = vsel %vm172, %v99, 0
  %vm176 = vcmask 1041408
  %v178 = vsel %vm176, %v163, 0
  %180 = vmatpush.bf16.msra.mxu0 %v162
  %181 = vmatpush.bf16.msra.mxu0 %v161
  %182 = vmatpush.bf16.msra.mxu0 %v160
  %183 = vmatpush.bf16.msra.mxu0 %v159
  %184 = vmatpush.bf16.msra.mxu0 %v158
  %185 = vmatpush.bf16.msra.mxu0 %v157
  %186 = vmatpush.bf16.msra.mxu0 %v156
  %187 = vmatpush.bf16.msra.mxu0 %v155
  %188 = vmatmul.bf16.gmra.mxu0 %v98
  %v189 = vpop.f32.mrf.mxu0
  %v190 = vadd.f32 %v119, %v189
  %v191 = vpop.f32.mrf.mxu0
  %192 = vdwg.mxu0
  %193 = vmatpush.bf16.msra.mxu0 0
  %194 = vmatpush.bf16.msra.mxu0 0
  %195 = vmatpush.bf16.msra.mxu0 0
  %196 = vmatpush.bf16.msra.mxu0 0
  %197 = vmatpush.bf16.msra.mxu0 0
  %198 = vmatpush.bf16.msra.mxu0 0
  %199 = vmatpush.bf16.msra.mxu0 0
  %200 = vmatpush.bf16.msra.mxu0 %v178
  %201 = vmatmul.bf16.gmra.mxu0 %v174
  %v202 = vpop.f32.mrf.mxu0
  %v203 = vadd.f32 %v190, %v202
  %v204 = vpop.f32.mrf.mxu0
  %205 = vdwg.mxu0
  %v206 = vmax.f32 %v203, 0.0
  %v207 = vld [vmem:[%s7] sm:$0x1]
  %v209 = vperm.slane %v207, 0
  %v211 = vmul.f32 %v206, %v209
  %212 = vadd.xlane.f32.xlu0 %v211
  %v213 = vpop.xlane.xlu0 %212
  %v214 = vld [vmem:[#allocation2] sm:$0x1]
  %v216 = vperm.slane %v214, 0
  %v218 = vadd.f32 %v213, %v216
  %vm219 = vcmask 7168
  %220 = vst.msk [vmem:[%s9] sm:$0xff] %vm219, %v218
  // Predicated region
  $region38: #{critic_forward.1} parent=0 // pred_check
    _
  $region39: #{critic_forward.1} parent=0 // pred_check_branch
    %222 = sbr.rel (0) target = $region41
  $region40: #{critic_forward.1} parent=0 // pred_region
    _
  $region41: #{critic_forward.1} parent=0 // pred_fallthru
    _
  // Predicated region
  $region42: #{critic_forward.1} parent=0 // pred_check
    _
  $region43: #{critic_forward.1} parent=0 // pred_check_branch
    %224 = sbr.rel (0) target = $region45
  $region44: #{critic_forward.1} parent=0 // pred_region
    _
  $region45: #{critic_forward.1} parent=0 // pred_fallthru
    _

</llo_original>
